<compile_context>
chip_gen: v7x
topology: tpu7x:2x2x1
jax: 0.10.0
libtpu: 0.0.40
codegen_flags: <defaults>
</compile_context>

<pallas_src>
import jax
import jax.numpy as jnp
from jax import lax
from jax.experimental import pallas as pl
from jax.experimental.pallas import tpu as pltpu

LANE = 128
SUBLANE = 8


def _round_up(x: int, m: int) -> int:
    return ((x + m - 1) // m) * m


def _node_classifier_kernel(x_ref, w_ref, b_ref, o_ref):
    # ReLU in the input's native dtype (bf16-native on v6e/v7x, f32 everywhere),
    # then an MXU matmul with f32 accumulation and a VPU bias add.
    pre = jnp.maximum(x_ref[...], 0).astype(w_ref.dtype)
    # (TN, in_dim) . (out_dim, in_dim), contracting dim 1 with dim 1 -> (TN, out_dim)
    acc = lax.dot_general(
        pre, w_ref[...],
        dimension_numbers=(((1,), (1,)), ((), ())),
        preferred_element_type=jnp.float32,
    )
    o_ref[...] = (acc + b_ref[...]).astype(o_ref.dtype)


def node_classifier_forward(x, weight, bias, *, row_tile=4096):
    """y = relu(x) @ W^T + b.

    x:      (N, in_dim)        -- pass bf16 directly if the producer already stores bf16
    weight: (out_dim, in_dim)  -- PyTorch nn.Linear layout
    bias:   (out_dim,)
    Returns (N, out_dim) in x.dtype.
    """
    N, in_dim = x.shape
    out_dim, in_dim_w = weight.shape
    assert in_dim_w == in_dim
    out_dtype = x.dtype

    b2 = bias.reshape(1, out_dim).astype(jnp.float32)

    # --- Row-tile sizing from the VMEM budget ---------------------------------
    in_lanes = _round_up(in_dim, LANE)
    out_lanes = _round_up(out_dim, LANE)
    # Streamed, double-buffered tiles (x in, y out). W and bias are resident
    # (constant index_map) so they are counted once, not doubled.
    bytes_per_row = 2 * (in_lanes * x.dtype.itemsize
                         + out_lanes * jnp.dtype(out_dtype).itemsize)
    resident = (_round_up(out_dim, SUBLANE) * in_lanes * weight.dtype.itemsize
                + SUBLANE * out_lanes * 4)
    tile_budget = 48 << 20  # leave headroom under v7x's 64 MiB physical VMEM
    max_tn = max(SUBLANE,
                 ((tile_budget - resident) // bytes_per_row) // SUBLANE * SUBLANE)

    TN = min(_round_up(row_tile, SUBLANE), _round_up(N, SUBLANE), max_tn)
    # Keep >= 2 grid steps whenever N allows so both v7x TensorCores get work.
    if TN >= N and N > SUBLANE:
        TN = min(TN, _round_up(pl.cdiv(N, 2), SUBLANE))

    grid = (pl.cdiv(N, TN),)  # ragged last row block handled by Pallas masking

    needed = TN * bytes_per_row + resident
    vmem_limit = int(min(max(needed + (4 << 20), 32 << 20), 56 << 20))

    cost = pl.CostEstimate(
        flops=2 * N * in_dim * out_dim,
        transcendentals=0,
        bytes_accessed=(x.size * x.dtype.itemsize
                        + weight.size * weight.dtype.itemsize
                        + b2.size * 4
                        + N * out_dim * jnp.dtype(out_dtype).itemsize),
    )

    return pl.pallas_call(
        _node_classifier_kernel,
        out_shape=jax.ShapeDtypeStruct((N, out_dim), out_dtype),
        grid_spec=pltpu.PrefetchScalarGridSpec(
            num_scalar_prefetch=0,
            grid=grid,
            in_specs=[
                pl.BlockSpec((TN, in_dim), lambda i: (i, 0)),       # x: streamed per row tile
                pl.BlockSpec((out_dim, in_dim), lambda i: (0, 0)),  # W: constant -> VMEM-resident
                pl.BlockSpec((1, out_dim), lambda i: (0, 0)),       # bias: constant
            ],
            out_specs=pl.BlockSpec((TN, out_dim), lambda i: (i, 0)),
        ),
        compiler_params=pltpu.CompilerParams(
            dimension_semantics=("parallel",),   # row tiles independent (v7x 2-TC)
            vmem_limit_bytes=vmem_limit,
        ),
        cost_estimate=cost,
    )(x, weight, b2)


if __name__ == "__main__":
    # Deterministic parameters mirroring nn.Linear(in_dim, out_dim), small shapes.
    in_dim, out_dim = 32, 16
    N = 8  # number of nodes

    key = jax.random.PRNGKey(0)
    kx, kw, kb = jax.random.split(key, 3)

    x = jax.random.normal(kx, (N, in_dim), dtype=jnp.float32)
    bound = 1.0 / (in_dim ** 0.5)
    weight = jax.random.uniform(kw, (out_dim, in_dim), minval=-bound, maxval=bound,
                                dtype=jnp.float32)
    bias = jax.random.uniform(kb, (out_dim,), minval=-bound, maxval=bound,
                              dtype=jnp.float32)

    # Reference (same math as the PyTorch forward).
    y_ref = jnp.maximum(x, 0.0) @ weight.T + bias

    y = jax.block_until_ready(node_classifier_forward(x, weight, bias))
    assert y.shape == (N, out_dim)
    assert jnp.allclose(y, y_ref, atol=1e-5, rtol=1e-5)

    # Multi-tile + ragged-last-block path (exercises the cdiv grid / write masking).
    N2 = 200
    x2 = jax.random.normal(kx, (N2, in_dim), dtype=jnp.float32)
    y2_ref = jnp.maximum(x2, 0.0) @ weight.T + bias
    y2 = jax.block_until_ready(
        node_classifier_forward(x2, weight, bias, row_tile=64))
    assert y2.shape == (N2, out_dim)
    assert jnp.allclose(y2, y2_ref, atol=1e-5, rtol=1e-5)

    print("KERNEL_OK")
</pallas_src>

<mosaic_0001>
module attributes {stable_mosaic.version = 11 : i64} {
  func.func @_node_classifier_kernel(%arg0: i32, %arg1: memref<8x32xf32, #tpu.memory_space<vmem>>, %arg2: memref<16x32xf32, #tpu.memory_space<vmem>>, %arg3: memref<1x16xf32, #tpu.memory_space<vmem>>, %arg4: memref<8x16xf32, #tpu.memory_space<vmem>>) attributes {dimension_semantics = [#tpu.dimension_semantics<parallel>], iteration_bounds = array<i64: 1>, scalar_prefetch = 0 : i64, scratch_operands = 0 : i64, tpu.core_type = #tpu.core_type<tc>, window_params = [{transform_indices = @transform_0, window_bounds = array<i64: 8, 32>}, {pipeline_mode = #tpu.pipeline_mode<synchronous>, transform_indices = @transform_1, window_bounds = array<i64: 16, 32>}, {pipeline_mode = #tpu.pipeline_mode<synchronous>, transform_indices = @transform_2, window_bounds = array<i64: 1, 16>}, {transform_indices = @transform_3, window_bounds = array<i64: 8, 16>}]} {
    %c0 = arith.constant 0 : index
    %c0_0 = arith.constant 0 : index
    %0 = vector.load %arg1[%c0, %c0_0] : memref<8x32xf32, #tpu.memory_space<vmem>>, vector<8x32xf32>
    %cst = arith.constant 0.000000e+00 : f32
    %1 = vector.broadcast %cst : f32 to vector<8x32xf32>
    %2 = arith.maximumf %0, %1 : vector<8x32xf32>
    %c0_1 = arith.constant 0 : index
    %c0_2 = arith.constant 0 : index
    %3 = vector.load %arg2[%c0_1, %c0_2] : memref<16x32xf32, #tpu.memory_space<vmem>>, vector<16x32xf32>
    %cst_3 = arith.constant dense<0.000000e+00> : vector<8x16xf32>
    %4 = tpu.matmul %2, %3, %cst_3 {dimension_numbers = #tpu.dot_dimension_numbers<[1], [1], [0], [0], [0, 0, 1, 0], [], []>} : vector<8x32xf32>, vector<16x32xf32>, vector<8x16xf32> -> vector<8x16xf32>
    %c0_4 = arith.constant 0 : index
    %c0_5 = arith.constant 0 : index
    %5 = vector.load %arg3[%c0_4, %c0_5] : memref<1x16xf32, #tpu.memory_space<vmem>>, vector<1x16xf32>
    %6 = vector.broadcast %5 : vector<1x16xf32> to vector<8x16xf32>
    %7 = arith.addf %4, %6 : vector<8x16xf32>
    %c0_6 = arith.constant 0 : index
    %c0_7 = arith.constant 0 : index
    %8 = vector.load %arg4[%c0_6, %c0_7] : memref<8x16xf32, #tpu.memory_space<vmem>>, vector<8x16xf32>
    tpu.vector_store %arg4[%c0_6, %c0_7], %7 {strides = array<i32>} : memref<8x16xf32, #tpu.memory_space<vmem>>, vector<8x16xf32>,
    return
  }
  func.func @transform_0(%arg0: i32) -> (i32, i32) {
    %c0_i32 = arith.constant 0 : i32
    %c0_i32_0 = arith.constant 0 : i32
    return %arg0, %c0_i32 : i32, i32
  }
  func.func @transform_1(%arg0: i32) -> (i32, i32) {
    %c0_i32 = arith.constant 0 : i32
    %c0_i32_0 = arith.constant 0 : i32
    %c0_i32_1 = arith.constant 0 : i32
    return %c0_i32, %c0_i32_0 : i32, i32
  }
  func.func @transform_2(%arg0: i32) -> (i32, i32) {
    %c0_i32 = arith.constant 0 : i32
    %c0_i32_0 = arith.constant 0 : i32
    %c0_i32_1 = arith.constant 0 : i32
    return %c0_i32, %c0_i32_0 : i32, i32
  }
  func.func @transform_3(%arg0: i32) -> (i32, i32) {
    %c0_i32 = arith.constant 0 : i32
    %c0_i32_0 = arith.constant 0 : i32
    return %arg0, %c0_i32 : i32, i32
  }
}

</mosaic_0001>

<llo_original>
// kernel: tpu_custom_call.1
$region0: #{tpu_custom_call.1}
  #allocation0 [shape = 'u32[]', space=smem, size = 0x4, offset = 0x4, fixed_abs, tag = 'smem constant byte address 0x4 - core index']
  #allocation1 [shape = 'u32[144,128]{1,0:T(1,128)}', space=vmem, size = 0x12000, scoped, tag = 'internal scratch']
  %s0 = inlined_call_operand.hbm [shape: f32[8,32], index: 0, kind: input, shape index: {}]
  %s1 = inlined_call_operand.hbm [shape: f32[16,32], index: 1, kind: input, shape index: {}]
  %s2 = inlined_call_operand.vmem [shape: f32[1,16], index: 2, kind: input, shape index: {}]
  %s3 = inlined_call_operand.hbm [shape: f32[8,16], index: 3, kind: output, shape index: {}]
  %s4 = sld [smem:[#allocation0]]
  $region30: #{tpu_custom_call.1} parent=0
    _
  %s6 = ssub.s32 1, %s4
  %s7 = scalar_select 0, %s6, %s4
  $region1: #{tpu_custom_call.1} parent=0
    #allocation2 [shape = 'u8[4096]{0}', space=vmem, size = 0x1000, scoped, tag = 'input window, operand 0, single buffered']
    #allocation3 [shape = 's32[1]{0}', space=sflag, size = 0x4, scoped, tag = 'scoped memory for tpu_custom_call.1']
    #allocation4 [shape = 's32[1]{0}', space=sflag, size = 0x4, scoped, tag = 'scoped memory for tpu_custom_call.1']
    #allocation5 [shape = 'u8[8192]{0}', space=vmem, size = 0x2000, scoped, tag = 'input window, operand 1, single buffered']
    #allocation6 [shape = 's32[1]{0}', space=sflag, size = 0x4, scoped, tag = 'scoped memory for tpu_custom_call.1']
    #allocation7 [shape = 'u8[4096]{0}', space=vmem, size = 0x1000, scoped, tag = 'output window, operand 0, single buffered']
    %8 = vsyncpa [#allocation3], 0
    %9 = vsyncpa [#allocation6], 0
    %10 = vsyncpa [#allocation4], 0
    // Predicated region
    $region2: #{tpu_custom_call.1} parent=1 // pred_check
      _
    $region3: #{tpu_custom_call.1} parent=1 // pred_check_branch
      %12 = sbr.rel (0) target = $region5
    $region4: #{tpu_custom_call.1} parent=1 // pred_region
      %s14 = ssub.s32 128, 128
      %15 = vsyncadd [#allocation3], %s14
      %s17 = sshll.u32 [#allocation2], 4
      %s18 = int_to_ptr.vmem [resolvable:$true] %s17
      %20 = dma.hbm_to_vmem [thread:$0]  %s0, 128, %s18, [#allocation3]
    $region5: #{tpu_custom_call.1} parent=1 // pred_fallthru
      _
    // Predicated region
    $region6: #{tpu_custom_call.1} parent=1 // pred_check
      _
    $region7: #{tpu_custom_call.1} parent=1 // pred_check_branch
      %22 = sbr.rel (0) target = $region9
    $region8: #{tpu_custom_call.1} parent=1 // pred_region
      %s24 = ssub.s32 256, 256
      %25 = vsyncadd [#allocation6], %s24
      %s26 = sshll.u32 [#allocation5], 4
      %s27 = int_to_ptr.vmem [resolvable:$true] %s26
      %32 = dma.hbm_to_vmem [thread:$0]  %s1, 256, %s27, [#allocation6], 128, 128, 8
    $region9: #{tpu_custom_call.1} parent=1 // pred_fallthru
      _
    // Predicated region
    $region10: #{tpu_custom_call.1} parent=1 // pred_check
      _
    $region11: #{tpu_custom_call.1} parent=1 // pred_check_branch
      %34 = sbr.rel (0) target = $region13
    $region12: #{tpu_custom_call.1} parent=1 // pred_region
      _
    $region13: #{tpu_custom_call.1} parent=1 // pred_fallthru
      _
    // Predicated region
    $region14: #{tpu_custom_call.1} parent=1 // pred_check
      _
    $region15: #{tpu_custom_call.1} parent=1 // pred_check_branch
      %36 = sbr.rel (0) target = $region17
    $region16: #{tpu_custom_call.1} parent=1 // pred_region
      %37 = dma.done [#allocation3], 128
    $region17: #{tpu_custom_call.1} parent=1 // pred_fallthru
      _
    // Predicated region
    $region18: #{tpu_custom_call.1} parent=1 // pred_check
      _
    $region19: #{tpu_custom_call.1} parent=1 // pred_check_branch
      %39 = sbr.rel (0) target = $region21
    $region20: #{tpu_custom_call.1} parent=1 // pred_region
      %40 = dma.done [#allocation6], 256
    $region21: #{tpu_custom_call.1} parent=1 // pred_fallthru
      _
    %v41 = vld [vmem:[#allocation2] sm:$0xff]
    %v42 = vmax.f32 %v41, 0.0
    %v43 = vld [vmem:[#allocation5] sm:$0xff]
    %v44 = vld [vmem:[#allocation5 + $0x8] sm:$0xff]
    %v45 = vld [vmem:[%s2] sm:$0x1]
    %v47 = vlaneseq
    %v48 = vshrl.u32 %v47, 7
    %v49 = vsub.s32 0, %v48
    %v50 = vrot.slane %v45, %v49
    %vm52 = vcmask 261120
    %v54 = vsel %vm52, %v42, 0
    %v57 = vsel %vm52, %v43, 0
    %v60 = vsel %vm52, %v44, 0
    %62 = vmatprep.subr.mxu0 0.0
    %63 = vmatpush1.xpose.msra.mxu0 %v57
    %64 = vmatprep.subr.mxu0 0.0
    %65 = vmatpush1.xpose.msra.mxu0 %v60
    %66 = vmatprep.subr.mxu0 0.0
    %67 = vmatpush1.xpose.msra.mxu0 0.0
    %68 = vmatprep.subr.mxu0 0.0
    %69 = vmatpush1.xpose.msra.mxu0 0.0
    %70 = vmatprep.subr.mxu0 0.0
    %71 = vmatpush1.xpose.msra.mxu0 0.0
    %72 = vmatprep.subr.mxu0 0.0
    %73 = vmatpush1.xpose.msra.mxu0 0.0
    %74 = vmatprep.subr.mxu0 0.0
    %75 = vmatpush1.xpose.msra.mxu0 0.0
    %76 = vmatprep.subr.mxu0 0.0
    %77 = vmatpush1.xpose.msra.mxu0 0.0
    %78 = vmatprep.subr.mxu0 0.0
    %79 = vmatpush1.xpose.msra.mxu0 0.0
    %80 = vmatprep.subr.mxu0 0.0
    %81 = vmatpush1.xpose.msra.mxu0 0.0
    %82 = vmatprep.subr.mxu0 0.0
    %83 = vmatpush1.xpose.msra.mxu0 0.0
    %84 = vmatprep.subr.mxu0 0.0
    %85 = vmatpush1.xpose.msra.mxu0 0.0
    %86 = vmatprep.subr.mxu0 0.0
    %87 = vmatpush1.xpose.msra.mxu0 0.0
    %88 = vmatprep.subr.mxu0 0.0
    %89 = vmatpush1.xpose.msra.mxu0 0.0
    %90 = vmatprep.subr.mxu0 0.0
    %91 = vmatpush1.xpose.msra.mxu0 0.0
    %92 = vmatprep.subr.mxu0 0.0
    %93 = vmatpush1.xpose.msra.mxu0 0.0
    %94 = vmatprep.subr.mxu0 0.0
    %95 = vmatpush1.xpose.msra.mxu0 0.0
    %96 = vmatprep.subr.mxu0 0.0
    %97 = vmatpush1.xpose.msra.mxu0 0.0
    %98 = vmatprep.subr.mxu0 0.0
    %99 = vmatpush1.xpose.msra.mxu0 0.0
    %100 = vmatprep.subr.mxu0 0.0
    %101 = vmatpush1.xpose.msra.mxu0 0.0
    %102 = vmatprep.subr.mxu0 0.0
    %103 = vmatpush1.xpose.msra.mxu0 0.0
    %104 = vmatprep.subr.mxu0 0.0
    %105 = vmatpush1.xpose.msra.mxu0 0.0
    %106 = vmatprep.subr.mxu0 0.0
    %107 = vmatpush1.xpose.msra.mxu0 0.0
    %108 = vmatprep.subr.mxu0 0.0
    %109 = vmatpush1.xpose.msra.mxu0 0.0
    %110 = vmatprep.subr.mxu0 0.0
    %111 = vmatpush1.xpose.msra.mxu0 0.0
    %112 = vmatprep.subr.mxu0 0.0
    %113 = vmatpush1.xpose.msra.mxu0 0.0
    %114 = vmatprep.subr.mxu0 0.0
    %115 = vmatpush1.xpose.msra.mxu0 0.0
    %116 = vmatprep.subr.mxu0 0.0
    %117 = vmatpush1.xpose.msra.mxu0 0.0
    %118 = vmatprep.subr.mxu0 0.0
    %119 = vmatpush1.xpose.msra.mxu0 0.0
    %120 = vmatprep.subr.mxu0 0.0
    %121 = vmatpush1.xpose.msra.mxu0 0.0
    %122 = vmatprep.subr.mxu0 0.0
    %123 = vmatpush1.xpose.msra.mxu0 0.0
    %124 = vmatprep.subr.mxu0 0.0
    %125 = vmatpush1.xpose.msra.mxu0 0.0
    %126 = vmatprep.mubr.f32.mxu0 0.0
    %127 = vmatmul.mubr.f32.gmra.mrb[0].mxu0 %v54
    %v128 = vpop.f32.mrb[0].mxu0
    %v129 = vadd.f32 %v50, %v128
    %v130 = vpop.f32.mrb[0].mxu0
    %131 = vdwg.mxu0
    %vm132 = vcmask 130048
    %133 = vst.msk [vmem:[#allocation7] sm:$0xff] %vm132, %v129
    // Predicated region
    $region22: #{tpu_custom_call.1} parent=1 // pred_check
      _
    $region23: #{tpu_custom_call.1} parent=1 // pred_check_branch
      %135 = sbr.rel (0) target = $region25
    $region24: #{tpu_custom_call.1} parent=1 // pred_region
      %s137 = ssub.s32 128, 128
      %138 = vsyncadd [#allocation4], %s137
      %s140 = sshll.u32 [#allocation7], 4
      %s141 = int_to_ptr.vmem [resolvable:$true] %s140
      %143 = dma.vmem_to_hbm [thread:$0]  %s141, 128, %s3, [#allocation4]
    $region25: #{tpu_custom_call.1} parent=1 // pred_fallthru
      _
    // Predicated region
    $region26: #{tpu_custom_call.1} parent=1 // pred_check
      _
    $region27: #{tpu_custom_call.1} parent=1 // pred_check_branch
      %145 = sbr.rel (0) target = $region29
    $region28: #{tpu_custom_call.1} parent=1 // pred_region
      %146 = dma.done [#allocation4], 128
    $region29: #{tpu_custom_call.1} parent=1 // pred_fallthru
      _
    %147 = vsyncpa [#allocation3], 1
    %148 = vsyncpa [#allocation6], 1
    %149 = vsyncpa [#allocation4], 1

</llo_original>
